<compile_context>
chip_gen: v5e
topology: v5e:2x2
jax: 0.10.0
libtpu: 0.0.40
codegen_flags: <defaults>
</compile_context>

<pallas_src>
import jax
import jax.numpy as jnp
from jax import lax
from jax.experimental import pallas as pl
from jax.experimental.pallas import tpu as pltpu


def _round_up(x, m):
    return (x + m - 1) // m * m


# ----------------------------------------------------------------------------
# One grid step == one GRU decode step.
#   gi   = onehot(tok) @ w_tok          (w_tok row v = emb[v] @ W_ih^T + b_ih)
#   gh   = h @ W_hh^T + b_hh            (lane-dense MXU matmul)
#   r,z  = sigmoid(gi[:, :2Hp] + gh[:, :2Hp])        (one fused EUP pass)
#   n    = tanh(gi_n + r * gh_n)
#   h'   = n + z * (h - n)
#   pred = h' @ W_fc^T + b_fc           (lane-dense, padded to 128 cols)
# Hidden state is carried in hout_ref (constant output block index).
# ----------------------------------------------------------------------------
def _gru_decode_kernel(tok_ref,   # VMEM (1, B, 1) int32  token ids for step t
                       h0_ref,    # VMEM (B, Hp)          initial hidden (padded)
                       wtok_ref,  # VMEM (O, GP)          fused token table
                       wh_ref,    # VMEM (Hp, GP)         W_hh^T, per-gate slots
                       bh_ref,    # VMEM (1, GP)          b_hh, per-gate slots
                       wfc_ref,   # VMEM (Hp, OP)         W_fc^T, padded
                       bfc_ref,   # VMEM (1, OP)          b_fc, padded
                       pred_ref,  # VMEM (1, B, OP) out   logits for step t
                       hout_ref): # VMEM (B, Hp)    out   resident hidden carry
    B = h0_ref.shape[0]
    O = wtok_ref.shape[0]
    Hp = wh_ref.shape[0]

    t = pl.program_id(0)

    @pl.when(t == 0)
    def _():
        hout_ref[...] = h0_ref[...]

    h = hout_ref[...]                                        # (B, Hp)

    # Embedding gather fused with the input-side gate matmul as a one-hot
    # matmul on the otherwise-idle MXU.
    tok = tok_ref[0]                                         # (B, 1) int32
    onehot = (lax.broadcasted_iota(jnp.int32, (B, O), 1) == tok).astype(jnp.float32)
    gi = jnp.dot(onehot, wtok_ref[...], preferred_element_type=jnp.float32)

    # Hidden-side gates: single lane-dense MXU matmul.
    gh = jnp.dot(h, wh_ref[...], preferred_element_type=jnp.float32) + bh_ref[...]

    # r and z share one fused sigmoid over 128-aligned lane slots.
    rz = jax.nn.sigmoid(gi[:, :2 * Hp] + gh[:, :2 * Hp])
    r = rz[:, :Hp]
    z = rz[:, Hp:]
    n = jnp.tanh(gi[:, 2 * Hp:] + r * gh[:, 2 * Hp:])

    h_new = n + z * (h - n)                                  # == (1-z)*n + z*h
    hout_ref[...] = h_new                                    # carried to step t+1

    # Output projection, lane-dense (B, OP) store.
    pred_ref[0] = (jnp.dot(h_new, wfc_ref[...], preferred_element_type=jnp.float32)
                   + bfc_ref[...])


@jax.jit
def decoder_forward_steps(tokens, hidden, params):
    """Teacher-forced T-step decode: equivalent to calling Decoder.forward T
    times in sequence, feeding tokens[t] at step t.

    Args:
      tokens: int (T, B) token ids.
      hidden: f32 (1, B, H) initial GRU hidden state.
    Returns:
      preds:  f32 (T, B, output_dim)
      hidden: f32 (1, B, H) final hidden state.
    """
    T, B = tokens.shape
    O, GP = params["w_tok_p"].shape
    Hp, OP = params["w_fc_p"].shape
    H = hidden.shape[-1]

    # Clamp ids (nn.Embedding would fault on OOB ids; one-hot makes OOB safe,
    # clamping keeps the behavior well-defined).
    tok = jnp.clip(tokens.astype(jnp.int32), 0, O - 1)[:, :, None]   # (T, B, 1)
    # Lane-dense hidden state: pad H -> Hp lanes with zeros.
    h0 = jnp.zeros((B, Hp), jnp.float32).at[:, :H].set(hidden[0])

    grid_spec = pltpu.PrefetchScalarGridSpec(
        num_scalar_prefetch=0,
        grid=(T,),
        in_specs=[
            pl.BlockSpec((1, B, 1), lambda t: (t, 0, 0)),   # tokens: new block per step
            pl.BlockSpec((B, Hp), lambda t: (0, 0)),        # h0 (used only at t==0)
            pl.BlockSpec((O, GP), lambda t: (0, 0)),        # weights: constant index
            pl.BlockSpec((Hp, GP), lambda t: (0, 0)),       #   -> VMEM-resident,
            pl.BlockSpec((1, GP), lambda t: (0, 0)),        #   DMA'd once for all T
            pl.BlockSpec((Hp, OP), lambda t: (0, 0)),
            pl.BlockSpec((1, OP), lambda t: (0, 0)),
        ],
        out_specs=(
            pl.BlockSpec((1, B, OP), lambda t: (t, 0, 0)),  # per-step logits
            pl.BlockSpec((B, Hp), lambda t: (0, 0)),        # resident hidden carry
        ),
    )

    preds_pad, h_pad = pl.pallas_call(
        _gru_decode_kernel,
        out_shape=(jax.ShapeDtypeStruct((T, B, OP), jnp.float32),
                   jax.ShapeDtypeStruct((B, Hp), jnp.float32)),
        grid_spec=grid_spec,
        compiler_params=pltpu.CompilerParams(
            dimension_semantics=("arbitrary",)),  # time axis carries the hidden state
    )(tok, h0, params["w_tok_p"], params["w_h_p"], params["b_h_p"],
      params["w_fc_p"], params["b_fc_p"])

    # Strip lane padding; hidden back to (1, B, H).
    return preds_pad[:, :, :O], h_pad[None, :, :H]


def decoder_forward(x_tokens, hidden, params):
    """Single decode step == the PyTorch module's forward.

    Args:
      x_tokens: int (batch,) token ids (PyTorch `x`).
      hidden:   f32 (1, batch, H) previous GRU hidden state.
    Returns:
      prediction: f32 (batch, output_dim)
      hidden_new: f32 (1, batch, H)
    """
    preds, h_new = decoder_forward_steps(x_tokens[None, :], hidden, params)
    return preds[0], h_new


def init_params(key, output_dim, hidden_dim, embedding_size):
    """Synthetic init mimicking the PyTorch module's parameter shapes, plus the
    fused / lane-padded tensors consumed by the kernel (per-gate 128-lane slots)."""
    ks = jax.random.split(key, 8)
    H, E, O = hidden_dim, embedding_size, output_dim
    s = 1.0 / jnp.sqrt(jnp.float32(H))

    def u(k, shape):
        return jax.random.uniform(k, shape, jnp.float32, -s, s)

    # nn.Embedding(output_dim, embedding_size): N(0, 1)
    embedding = jax.random.normal(ks[0], (O, E), jnp.float32)

    # nn.GRU weights, PyTorch layout: (3H, E) / (3H, H), gate order r, z, n.
    w_ih = u(ks[1], (3 * H, E))
    w_hh = u(ks[2], (3 * H, H))
    b_ih = u(ks[3], (3 * H,))
    b_hh = u(ks[4], (3 * H,))

    # nn.Linear(hidden_dim * D, output_dim), D = 1
    w_fc = u(ks[5], (O, H))
    b_fc = u(ks[6], (O,))

    Hp = _round_up(H, 128)      # per-gate lane slot width (lane-dense)
    GP = 3 * Hp                 # padded gate width: r/z/n at offsets 0/Hp/2Hp
    OP = _round_up(O, 128)      # padded FC output width

    # Fused per-token table: row v = embedding[v] @ W_ih^T + b_ih  (O, 3H),
    # re-laid out into per-gate 128-lane slots and zero-padded.
    w_tok = embedding @ w_ih.T + b_ih[None, :]               # (O, 3H)
    w_tok_p = jnp.zeros((O, GP), jnp.float32)
    w_h_p = jnp.zeros((Hp, GP), jnp.float32)
    b_h_p = jnp.zeros((1, GP), jnp.float32)
    w_hh_t = w_hh.T                                          # (H, 3H)
    for g in range(3):
        w_tok_p = w_tok_p.at[:, g * Hp:g * Hp + H].set(w_tok[:, g * H:(g + 1) * H])
        w_h_p = w_h_p.at[:H, g * Hp:g * Hp + H].set(w_hh_t[:, g * H:(g + 1) * H])
        b_h_p = b_h_p.at[:, g * Hp:g * Hp + H].set(b_hh[None, g * H:(g + 1) * H])

    w_fc_p = jnp.zeros((Hp, OP), jnp.float32).at[:H, :O].set(w_fc.T)
    b_fc_p = jnp.zeros((1, OP), jnp.float32).at[:, :O].set(b_fc[None, :])

    return {
        "embedding": embedding,
        # kernel tensors (fused / lane-padded)
        "w_tok_p": w_tok_p, "w_h_p": w_h_p, "b_h_p": b_h_p,
        "w_fc_p": w_fc_p, "b_fc_p": b_fc_p,
        # raw PyTorch-layout weights for the pure-JAX reference
        "_w_ih": w_ih, "_w_hh": w_hh, "_b_ih": b_ih, "_b_hh": b_hh,
        "_w_fc": w_fc, "_b_fc": b_fc,
    }


def decoder_reference(x_tokens, hidden, p):
    """Pure-JAX reference mirroring torch.nn.GRU (single step) + Linear."""
    H = p["_w_hh"].shape[1]
    emb = jnp.take(p["embedding"], x_tokens, axis=0)
    h = hidden[0]
    gi = emb @ p["_w_ih"].T + p["_b_ih"]
    gh = h @ p["_w_hh"].T + p["_b_hh"]
    r = jax.nn.sigmoid(gi[:, 0:H] + gh[:, 0:H])
    z = jax.nn.sigmoid(gi[:, H:2 * H] + gh[:, H:2 * H])
    n = jnp.tanh(gi[:, 2 * H:] + r * gh[:, 2 * H:])
    h_new = (1.0 - z) * n + z * h
    pred = h_new @ p["_w_fc"].T + p["_b_fc"]
    return pred, h_new[None]


def decoder_reference_steps(tokens, hidden, p):
    preds = []
    h = hidden
    for t in range(tokens.shape[0]):
        pred, h = decoder_reference(tokens[t], h, p)
        preds.append(pred)
    return jnp.stack(preds, axis=0), h


if __name__ == "__main__":
    # Small, module-consistent shapes.
    output_dim = 16      # vocab size
    hidden_dim = 32
    embedding_size = 32
    batch = 8
    T = 4                # multi-step (teacher-forced) decode length

    key = jax.random.PRNGKey(0)
    k_p, k_x, k_h, k_t = jax.random.split(key, 4)

    params = init_params(k_p, output_dim, hidden_dim, embedding_size)
    x = jax.random.randint(k_x, (batch,), 0, output_dim, dtype=jnp.int32)
    hidden = jax.random.normal(k_h, (1, batch, hidden_dim), jnp.float32)
    tokens_T = jax.random.randint(k_t, (T, batch), 0, output_dim, dtype=jnp.int32)

    # --- Single step (the PyTorch module's forward) ---
    pred, hidden_new = decoder_forward(x, hidden, params)
    jax.block_until_ready((pred, hidden_new))

    pred_ref, hidden_ref = decoder_reference(x, hidden, params)
    assert pred.shape == (batch, output_dim)
    assert hidden_new.shape == (1, batch, hidden_dim)
    assert jnp.allclose(pred, pred_ref, atol=1e-4, rtol=1e-4)
    assert jnp.allclose(hidden_new, hidden_ref, atol=1e-4, rtol=1e-4)

    # --- T-step decode grid (amortized launch / weight DMA) ---
    preds_T, hidden_T = decoder_forward_steps(tokens_T, hidden, params)
    jax.block_until_ready((preds_T, hidden_T))

    preds_T_ref, hidden_T_ref = decoder_reference_steps(tokens_T, hidden, params)
    assert preds_T.shape == (T, batch, output_dim)
    assert hidden_T.shape == (1, batch, hidden_dim)
    assert jnp.allclose(preds_T, preds_T_ref, atol=5e-4, rtol=5e-4)
    assert jnp.allclose(hidden_T, hidden_T_ref, atol=5e-4, rtol=5e-4)

    print("KERNEL_OK")
</pallas_src>

<mosaic_0001>
module attributes {stable_mosaic.version = 11 : i64} {
  func.func @_gru_decode_kernel(%arg0: i32, %arg1: memref<1x8x1xi32, #tpu.memory_space<vmem>>, %arg2: memref<8x128xf32, #tpu.memory_space<vmem>>, %arg3: memref<16x384xf32, #tpu.memory_space<vmem>>, %arg4: memref<128x384xf32, #tpu.memory_space<vmem>>, %arg5: memref<1x384xf32, #tpu.memory_space<vmem>>, %arg6: memref<128x128xf32, #tpu.memory_space<vmem>>, %arg7: memref<1x128xf32, #tpu.memory_space<vmem>>, %arg8: memref<1x8x128xf32, #tpu.memory_space<vmem>>, %arg9: memref<8x128xf32, #tpu.memory_space<vmem>>) attributes {dimension_semantics = [#tpu.dimension_semantics<arbitrary>], iteration_bounds = array<i64: 1>, scalar_prefetch = 0 : i64, scratch_operands = 0 : i64, tpu.core_type = #tpu.core_type<tc>, window_params = [{transform_indices = @transform_0, window_bounds = array<i64: 1, 8, 1>}, {pipeline_mode = #tpu.pipeline_mode<synchronous>, transform_indices = @transform_1, window_bounds = array<i64: 8, 128>}, {pipeline_mode = #tpu.pipeline_mode<synchronous>, transform_indices = @transform_2, window_bounds = array<i64: 16, 384>}, {pipeline_mode = #tpu.pipeline_mode<synchronous>, transform_indices = @transform_3, window_bounds = array<i64: 128, 384>}, {pipeline_mode = #tpu.pipeline_mode<synchronous>, transform_indices = @transform_4, window_bounds = array<i64: 1, 384>}, {pipeline_mode = #tpu.pipeline_mode<synchronous>, transform_indices = @transform_5, window_bounds = array<i64: 128, 128>}, {pipeline_mode = #tpu.pipeline_mode<synchronous>, transform_indices = @transform_6, window_bounds = array<i64: 1, 128>}, {transform_indices = @transform_7, window_bounds = array<i64: 1, 8, 128>}, {pipeline_mode = #tpu.pipeline_mode<synchronous>, transform_indices = @transform_8, window_bounds = array<i64: 8, 128>}]} {
    %c0_i32 = arith.constant 0 : i32
    %0 = arith.cmpi eq, %arg0, %c0_i32 : i32
    %1 = arith.extui %0 : i1 to i32
    %c0_i32_0 = arith.constant 0 : i32
    %2 = arith.cmpi ne, %1, %c0_i32_0 : i32
    scf.if %2 {
      %c0_23 = arith.constant 0 : index
      %c0_24 = arith.constant 0 : index
      %45 = vector.load %arg2[%c0_23, %c0_24] : memref<8x128xf32, #tpu.memory_space<vmem>>, vector<8x128xf32>
      %c0_25 = arith.constant 0 : index
      %c0_26 = arith.constant 0 : index
      %46 = vector.load %arg9[%c0_25, %c0_26] : memref<8x128xf32, #tpu.memory_space<vmem>>, vector<8x128xf32>
      tpu.vector_store %arg9[%c0_25, %c0_26], %45 {strides = array<i32>} : memref<8x128xf32, #tpu.memory_space<vmem>>, vector<8x128xf32>,
    } else {
    }
    %c0 = arith.constant 0 : index
    %c0_1 = arith.constant 0 : index
    %3 = vector.load %arg9[%c0, %c0_1] : memref<8x128xf32, #tpu.memory_space<vmem>>, vector<8x128xf32>
    %c0_2 = arith.constant 0 : index
    %c0_3 = arith.constant 0 : index
    %c0_4 = arith.constant 0 : index
    %4 = vector.load %arg1[%c0_2, %c0_3, %c0_4] : memref<1x8x1xi32, #tpu.memory_space<vmem>>, vector<1x8x1xi32>
    %5 = vector.shape_cast %4 : vector<1x8x1xi32> to vector<8x1xi32>
    %6 = tpu.iota {dimensions = array<i32: 1>} : vector<8x16xi32>
    %7 = vector.broadcast %5 : vector<8x1xi32> to vector<8x16xi32>
    %8 = arith.cmpi eq, %6, %7 : vector<8x16xi32>
    %9 = arith.extui %8 : vector<8x16xi1> to vector<8x16xi32>
    %10 = arith.sitofp %9 : vector<8x16xi32> to vector<8x16xf32>
    %c0_5 = arith.constant 0 : index
    %c0_6 = arith.constant 0 : index
    %11 = vector.load %arg3[%c0_5, %c0_6] : memref<16x384xf32, #tpu.memory_space<vmem>>, vector<16x384xf32>
    %cst = arith.constant dense<0.000000e+00> : vector<8x384xf32>
    %12 = tpu.matmul %10, %11, %cst {dimension_numbers = #tpu.dot_dimension_numbers<[1], [0], [0], [1], [0, 0, 1, 1], [], []>} : vector<8x16xf32>, vector<16x384xf32>, vector<8x384xf32> -> vector<8x384xf32>
    %c0_7 = arith.constant 0 : index
    %c0_8 = arith.constant 0 : index
    %13 = vector.load %arg4[%c0_7, %c0_8] : memref<128x384xf32, #tpu.memory_space<vmem>>, vector<128x384xf32>
    %cst_9 = arith.constant dense<0.000000e+00> : vector<8x384xf32>
    %14 = tpu.matmul %3, %13, %cst_9 {dimension_numbers = #tpu.dot_dimension_numbers<[1], [0], [0], [1], [0, 0, 1, 1], [], []>} : vector<8x128xf32>, vector<128x384xf32>, vector<8x384xf32> -> vector<8x384xf32>
    %c0_10 = arith.constant 0 : index
    %c0_11 = arith.constant 0 : index
    %15 = vector.load %arg5[%c0_10, %c0_11] : memref<1x384xf32, #tpu.memory_space<vmem>>, vector<1x384xf32>
    %16 = vector.broadcast %15 : vector<1x384xf32> to vector<8x384xf32>
    %17 = arith.addf %14, %16 : vector<8x384xf32>
    %18 = vector.extract_strided_slice %12 {offsets = [0, 0], sizes = [8, 256], strides = [1, 1]} : vector<8x384xf32> to vector<8x256xf32>
    %19 = vector.extract_strided_slice %17 {offsets = [0, 0], sizes = [8, 256], strides = [1, 1]} : vector<8x384xf32> to vector<8x256xf32>
    %20 = arith.addf %18, %19 : vector<8x256xf32>
    %21 = arith.negf %20 : vector<8x256xf32>
    %22 = math.exp %21 : vector<8x256xf32>
    %cst_12 = arith.constant 1.000000e+00 : f32
    %23 = vector.broadcast %cst_12 : f32 to vector<8x256xf32>
    %24 = arith.addf %23, %22 : vector<8x256xf32>
    %25 = arith.divf %23, %24 : vector<8x256xf32>
    %26 = vector.extract_strided_slice %25 {offsets = [0, 0], sizes = [8, 128], strides = [1, 1]} : vector<8x256xf32> to vector<8x128xf32>
    %27 = vector.extract_strided_slice %25 {offsets = [0, 128], sizes = [8, 128], strides = [1, 1]} : vector<8x256xf32> to vector<8x128xf32>
    %28 = vector.extract_strided_slice %12 {offsets = [0, 256], sizes = [8, 128], strides = [1, 1]} : vector<8x384xf32> to vector<8x128xf32>
    %29 = vector.extract_strided_slice %17 {offsets = [0, 256], sizes = [8, 128], strides = [1, 1]} : vector<8x384xf32> to vector<8x128xf32>
    %30 = arith.mulf %26, %29 : vector<8x128xf32>
    %31 = arith.addf %28, %30 : vector<8x128xf32>
    %32 = math.tanh %31 : vector<8x128xf32>
    %33 = arith.subf %3, %32 : vector<8x128xf32>
    %34 = arith.mulf %27, %33 : vector<8x128xf32>
    %35 = arith.addf %32, %34 : vector<8x128xf32>
    %c0_13 = arith.constant 0 : index
    %c0_14 = arith.constant 0 : index
    %36 = vector.load %arg9[%c0_13, %c0_14] : memref<8x128xf32, #tpu.memory_space<vmem>>, vector<8x128xf32>
    tpu.vector_store %arg9[%c0_13, %c0_14], %35 {strides = array<i32>} : memref<8x128xf32, #tpu.memory_space<vmem>>, vector<8x128xf32>,
    %c0_15 = arith.constant 0 : index
    %c0_16 = arith.constant 0 : index
    %37 = vector.load %arg6[%c0_15, %c0_16] : memref<128x128xf32, #tpu.memory_space<vmem>>, vector<128x128xf32>
    %cst_17 = arith.constant dense<0.000000e+00> : vector<8x128xf32>
    %38 = tpu.matmul %35, %37, %cst_17 {dimension_numbers = #tpu.dot_dimension_numbers<[1], [0], [0], [1], [0, 0, 1, 1], [], []>} : vector<8x128xf32>, vector<128x128xf32>, vector<8x128xf32> -> vector<8x128xf32>
    %c0_18 = arith.constant 0 : index
    %c0_19 = arith.constant 0 : index
    %39 = vector.load %arg7[%c0_18, %c0_19] : memref<1x128xf32, #tpu.memory_space<vmem>>, vector<1x128xf32>
    %40 = vector.broadcast %39 : vector<1x128xf32> to vector<8x128xf32>
    %41 = arith.addf %38, %40 : vector<8x128xf32>
    %c0_20 = arith.constant 0 : index
    %c0_21 = arith.constant 0 : index
    %c0_22 = arith.constant 0 : index
    %42 = vector.load %arg8[%c0_20, %c0_21, %c0_22] : memref<1x8x128xf32, #tpu.memory_space<vmem>>, vector<1x8x128xf32>
    %43 = vector.shape_cast %42 : vector<1x8x128xf32> to vector<8x128xf32>
    %44 = vector.shape_cast %41 : vector<8x128xf32> to vector<1x8x128xf32>
    tpu.vector_store %arg8[%c0_20, %c0_21, %c0_22], %44 {strides = array<i32>} : memref<1x8x128xf32, #tpu.memory_space<vmem>>, vector<1x8x128xf32>,
    return
  }
  func.func @transform_0(%arg0: i32) -> (i32, i32, i32) {
    %c0_i32 = arith.constant 0 : i32
    %c0_i32_0 = arith.constant 0 : i32
    %c0_i32_1 = arith.constant 0 : i32
    return %arg0, %c0_i32, %c0_i32_0 : i32, i32, i32
  }
  func.func @transform_1(%arg0: i32) -> (i32, i32) {
    %c0_i32 = arith.constant 0 : i32
    %c0_i32_0 = arith.constant 0 : i32
    %c0_i32_1 = arith.constant 0 : i32
    return %c0_i32, %c0_i32_0 : i32, i32
  }
  func.func @transform_2(%arg0: i32) -> (i32, i32) {
    %c0_i32 = arith.constant 0 : i32
    %c0_i32_0 = arith.constant 0 : i32
    %c0_i32_1 = arith.constant 0 : i32
    return %c0_i32, %c0_i32_0 : i32, i32
  }
  func.func @transform_3(%arg0: i32) -> (i32, i32) {
    %c0_i32 = arith.constant 0 : i32
    %c0_i32_0 = arith.constant 0 : i32
    %c0_i32_1 = arith.constant 0 : i32
    return %c0_i32, %c0_i32_0 : i32, i32
  }
  func.func @transform_4(%arg0: i32) -> (i32, i32) {
    %c0_i32 = arith.constant 0 : i32
    %c0_i32_0 = arith.constant 0 : i32
    %c0_i32_1 = arith.constant 0 : i32
    return %c0_i32, %c0_i32_0 : i32, i32
  }
  func.func @transform_5(%arg0: i32) -> (i32, i32) {
    %c0_i32 = arith.constant 0 : i32
    %c0_i32_0 = arith.constant 0 : i32
    %c0_i32_1 = arith.constant 0 : i32
    return %c0_i32, %c0_i32_0 : i32, i32
  }
  func.func @transform_6(%arg0: i32) -> (i32, i32) {
    %c0_i32 = arith.constant 0 : i32
    %c0_i32_0 = arith.constant 0 : i32
    %c0_i32_1 = arith.constant 0 : i32
    return %c0_i32, %c0_i32_0 : i32, i32
  }
  func.func @transform_7(%arg0: i32) -> (i32, i32, i32) {
    %c0_i32 = arith.constant 0 : i32
    %c0_i32_0 = arith.constant 0 : i32
    %c0_i32_1 = arith.constant 0 : i32
    return %arg0, %c0_i32, %c0_i32_0 : i32, i32, i32
  }
  func.func @transform_8(%arg0: i32) -> (i32, i32) {
    %c0_i32 = arith.constant 0 : i32
    %c0_i32_0 = arith.constant 0 : i32
    %c0_i32_1 = arith.constant 0 : i32
    return %c0_i32, %c0_i32_0 : i32, i32
  }
}

</mosaic_0001>

<llo_original>
// kernel: decoder_forward_steps.1
$region0: #{decoder_forward_steps.1}
  #allocation0 [shape = 'u32[]', space=smem, size = 0x4, offset = 0x4, fixed_abs, tag = 'smem constant byte address 0x4 - core index']
  #allocation1 [shape = 'u32[72,128]{1,0:T(1,128)}', space=vmem, size = 0x9000, scoped, tag = 'internal scratch']
  %s0 = inlined_call_operand.vmem [shape: s32[1,8,1], index: 0, kind: input, shape index: {}]
  %s1 = inlined_call_operand.vmem [shape: f32[8,128], index: 1, kind: input, shape index: {}]
  %s2 = inlined_call_operand.hbm [shape: f32[16,384], index: 2, kind: input, shape index: {}]
  %s3 = inlined_call_operand.hbm [shape: f32[128,384], index: 3, kind: input, shape index: {}]
  %s4 = inlined_call_operand.vmem [shape: f32[1,384], index: 4, kind: input, shape index: {}]
  %s5 = inlined_call_operand.hbm [shape: f32[128,128], index: 5, kind: input, shape index: {}]
  %s6 = inlined_call_operand.vmem [shape: f32[1,128], index: 6, kind: input, shape index: {}]
  %s7 = inlined_call_operand.hbm [shape: f32[1,8,128], index: 7, kind: output, shape index: {0}]
  %s8 = inlined_call_operand.vmem [shape: f32[8,128], index: 8, kind: output, shape index: {1}]
  %9 = xla_tuple %s7, %s8
  %s10 = sld [smem:[#allocation0]]
  $region62: #{decoder_forward_steps.1} parent=0
    _
  %s12 = ssub.s32 1, %s10
  %s13 = scalar_select 0, %s12, %s10
  $region1: #{decoder_forward_steps.1} parent=0
    #allocation2 [shape = 'u8[24576]{0}', space=vmem, size = 0x6000, scoped, tag = 'input window, operand 2, single buffered']
    #allocation3 [shape = 's32[1]{0}', space=sflag, size = 0x4, scoped, tag = 'scoped memory for decoder_forward_steps.1']
    #allocation4 [shape = 's32[1]{0}', space=sflag, size = 0x4, scoped, tag = 'scoped memory for decoder_forward_steps.1']
    #allocation5 [shape = 'u8[196608]{0}', space=vmem, size = 0x30000, scoped, tag = 'input window, operand 3, single buffered']
    #allocation6 [shape = 's32[1]{0}', space=sflag, size = 0x4, scoped, tag = 'scoped memory for decoder_forward_steps.1']
    #allocation7 [shape = 'u8[65536]{0}', space=vmem, size = 0x10000, scoped, tag = 'input window, operand 5, single buffered']
    #allocation8 [shape = 'u8[4096]{0}', space=vmem, size = 0x1000, scoped, tag = 'output window, operand 0, single buffered']
    %14 = vsyncpa [#allocation3], 0
    %15 = vsyncpa [#allocation6], 0
    %16 = vsyncpa [#allocation4], 0
    // Predicated region
    $region2: #{decoder_forward_steps.1} parent=1 // pred_check
      _
    $region3: #{decoder_forward_steps.1} parent=1 // pred_check_branch
      %18 = sbr.rel (0) target = $region5
    $region4: #{decoder_forward_steps.1} parent=1 // pred_region
      _
    $region5: #{decoder_forward_steps.1} parent=1 // pred_fallthru
      _
    // Predicated region
    $region6: #{decoder_forward_steps.1} parent=1 // pred_check
      _
    $region7: #{decoder_forward_steps.1} parent=1 // pred_check_branch
      %20 = sbr.rel (0) target = $region9
    $region8: #{decoder_forward_steps.1} parent=1 // pred_region
      _
    $region9: #{decoder_forward_steps.1} parent=1 // pred_fallthru
      _
    // Predicated region
    $region10: #{decoder_forward_steps.1} parent=1 // pred_check
      _
    $region11: #{decoder_forward_steps.1} parent=1 // pred_check_branch
      %22 = sbr.rel (0) target = $region13
    $region12: #{decoder_forward_steps.1} parent=1 // pred_region
      %24 = vsyncadd [#allocation3], 0
      %s25 = sshll.u32 %s2, 4
      %s26 = int_to_ptr.hbm [resolvable:$true] %s25
      %s27 = sshll.u32 [#allocation2], 4
      %s28 = int_to_ptr.vmem [resolvable:$true] %s27
      %33 = dma.hbm_to_vmem [thread:$0]  %s26, 768, %s28, [#allocation3], 384, 384, 24
    $region13: #{decoder_forward_steps.1} parent=1 // pred_fallthru
      _
    // Predicated region
    $region14: #{decoder_forward_steps.1} parent=1 // pred_check
      _
    $region15: #{decoder_forward_steps.1} parent=1 // pred_check_branch
      %35 = sbr.rel (0) target = $region17
    $region16: #{decoder_forward_steps.1} parent=1 // pred_region
      %37 = vsyncadd [#allocation6], 0
      %s38 = sshll.u32 %s3, 4
      %s39 = int_to_ptr.hbm [resolvable:$true] %s38
      %s40 = sshll.u32 [#allocation5], 4
      %s41 = int_to_ptr.vmem [resolvable:$true] %s40
      %46 = dma.hbm_to_vmem [thread:$0]  %s39, 6144, %s41, [#allocation6], 384, 384, 24
    $region17: #{decoder_forward_steps.1} parent=1 // pred_fallthru
      _
    // Predicated region
    $region18: #{decoder_forward_steps.1} parent=1 // pred_check
      _
    $region19: #{decoder_forward_steps.1} parent=1 // pred_check_branch
      %48 = sbr.rel (0) target = $region21
    $region20: #{decoder_forward_steps.1} parent=1 // pred_region
      _
    $region21: #{decoder_forward_steps.1} parent=1 // pred_fallthru
      _
    // Predicated region
    $region22: #{decoder_forward_steps.1} parent=1 // pred_check
      _
    $region23: #{decoder_forward_steps.1} parent=1 // pred_check_branch
      %50 = sbr.rel (0) target = $region25
    $region24: #{decoder_forward_steps.1} parent=1 // pred_region
      %52 = vsyncadd [#allocation6], 0
      %s53 = sshll.u32 %s5, 4
      %s54 = int_to_ptr.hbm [resolvable:$true] %s53
      %s55 = sshll.u32 [#allocation7], 4
      %s56 = int_to_ptr.vmem [resolvable:$true] %s55
      %61 = dma.hbm_to_vmem [thread:$0]  %s54, 2048, %s56, [#allocation6], 128, 128, 8
    $region25: #{decoder_forward_steps.1} parent=1 // pred_fallthru
      _
    // Predicated region
    $region26: #{decoder_forward_steps.1} parent=1 // pred_check
      _
    $region27: #{decoder_forward_steps.1} parent=1 // pred_check_branch
      %63 = sbr.rel (0) target = $region29
    $region28: #{decoder_forward_steps.1} parent=1 // pred_region
      _
    $region29: #{decoder_forward_steps.1} parent=1 // pred_fallthru
      _
    // Predicated region
    $region30: #{decoder_forward_steps.1} parent=1 // pred_check
      _
    $region31: #{decoder_forward_steps.1} parent=1 // pred_check_branch
      %65 = sbr.rel (0) target = $region33
    $region32: #{decoder_forward_steps.1} parent=1 // pred_region
      %67 = dma.done [#allocation3], 768
    $region33: #{decoder_forward_steps.1} parent=1 // pred_fallthru
      _
    // Predicated region
    $region34: #{decoder_forward_steps.1} parent=1 // pred_check
      _
    $region35: #{decoder_forward_steps.1} parent=1 // pred_check_branch
      %69 = sbr.rel (0) target = $region37
    $region36: #{decoder_forward_steps.1} parent=1 // pred_region
      %71 = dma.done [#allocation6], 6144
    $region37: #{decoder_forward_steps.1} parent=1 // pred_fallthru
      _
    // Predicated region
    $region38: #{decoder_forward_steps.1} parent=1 // pred_check
      _
    $region39: #{decoder_forward_steps.1} parent=1 // pred_check_branch
      %73 = sbr.rel (0) target = $region41
    $region40: #{decoder_forward_steps.1} parent=1 // pred_region
      %75 = dma.done [#allocation6], 2048
    $region41: #{decoder_forward_steps.1} parent=1 // pred_fallthru
      _
    %p76 = scmp.eq.s32.totalorder 0, 0
    // Predicated region
    $region42: #{decoder_forward_steps.1} parent=1 // pred_check
      %p77 = pneg %p76
    $region43: #{decoder_forward_steps.1} parent=1 // pred_check_branch
      %79 = sbr.rel (%p77) target = $region45
    $region44: #{decoder_forward_steps.1} parent=1 // pred_region
      %v80 = vld [vmem:[%s1] sm:$0xff]
      %81 = vst [vmem:[%s8] sm:$0xff] %v80
    $region45: #{decoder_forward_steps.1} parent=1 // pred_fallthru
      _
    %v82 = vld [vmem:[%s8] sm:$0xff]
    %v83 = vld [vmem:[%s0] sm:$0xff]
    %v84 = vlaneseq
    %v85 = vand.u32 %v84, 127
    %86 = vset.pattern.permute.xlu0 0
    %87 = vperm.xlu0 %86, %v83
    %v88 = vpop.permute.xlu0 %87
    %vm89 = vcmp.eq.s32.totalorder %v85, %v88
    %v90 = vsel %vm89, 1, 0
    %v91 = vcvt.s32.f32 %v90
    %v92 = vld [vmem:[#allocation2] sm:$0xff]
    %v93 = vld [vmem:[#allocation2 + $0x8] sm:$0xff]
    %v94 = vld [vmem:[#allocation2 + $0x10] sm:$0xff]
    %v95 = vld [vmem:[#allocation2 + $0x18] sm:$0xff]
    %v96 = vld [vmem:[#allocation2 + $0x20] sm:$0xff]
    %v97 = vld [vmem:[#allocation2 + $0x28] sm:$0xff]
    %vm98 = vcmask 130048
    %v100 = vsel %vm98, %v91, 0
    %102 = vmatpush.msra.mxu0 0.0
    %103 = vmatpush.msra.mxu0 0.0
    %104 = vmatpush.msra.mxu0 0.0
    %105 = vmatpush.msra.mxu0 0.0
    %106 = vmatpush.msra.mxu0 0.0
    %107 = vmatpush.msra.mxu0 0.0
    %108 = vmatpush.msra.mxu0 0.0
    %109 = vmatpush.msra.mxu0 0.0
    %110 = vmatpush.msra.mxu0 0.0
    %111 = vmatpush.msra.mxu0 0.0
    %112 = vmatpush.msra.mxu0 0.0
    %113 = vmatpush.msra.mxu0 0.0
    %114 = vmatpush.msra.mxu0 0.0
    %115 = vmatpush.msra.mxu0 0.0
    %116 = vmatpush.msra.mxu0 %v95
    %117 = vmatpush.msra.mxu0 %v92
    %118 = vmatmul.f32.gmra.mxu0 %v100
    %v119 = vpop.f32.mrf.mxu0
    %v120 = vadd.f32 0.0, %v119
    %121 = vdwg.mxu0
    %122 = vmatpush.msra.mxu0 0.0
    %123 = vmatpush.msra.mxu0 0.0
    %124 = vmatpush.msra.mxu0 0.0
    %125 = vmatpush.msra.mxu0 0.0
    %126 = vmatpush.msra.mxu0 0.0
    %127 = vmatpush.msra.mxu0 0.0
    %128 = vmatpush.msra.mxu0 0.0
    %129 = vmatpush.msra.mxu0 0.0
    %130 = vmatpush.msra.mxu0 0.0
    %131 = vmatpush.msra.mxu0 0.0
    %132 = vmatpush.msra.mxu0 0.0
    %133 = vmatpush.msra.mxu0 0.0
    %134 = vmatpush.msra.mxu0 0.0
    %135 = vmatpush.msra.mxu0 0.0
    %136 = vmatpush.msra.mxu0 %v96
    %137 = vmatpush.msra.mxu0 %v93
    %138 = vmatmul.f32.gmra.mxu0 %v100
    %v139 = vpop.f32.mrf.mxu0
    %v140 = vadd.f32 0.0, %v139
    %141 = vdwg.mxu0
    %142 = vmatpush.msra.mxu0 0.0
    %143 = vmatpush.msra.mxu0 0.0
    %144 = vmatpush.msra.mxu0 0.0
    %145 = vmatpush.msra.mxu0 0.0
    %146 = vmatpush.msra.mxu0 0.0
    %147 = vmatpush.msra.mxu0 0.0
    %148 = vmatpush.msra.mxu0 0.0
    %149 = vmatpush.msra.mxu0 0.0
    %150 = vmatpush.msra.mxu0 0.0
    %151 = vmatpush.msra.mxu0 0.0
    %152 = vmatpush.msra.mxu0 0.0
    %153 = vmatpush.msra.mxu0 0.0
    %154 = vmatpush.msra.mxu0 0.0
    %155 = vmatpush.msra.mxu0 0.0
    %156 = vmatpush.msra.mxu0 %v97
    %157 = vmatpush.msra.mxu0 %v94
    %158 = vmatmul.f32.gmra.mxu0 %v100
    %v159 = vpop.f32.mrf.mxu0
    %v160 = vadd.f32 0.0, %v159
    %161 = vdwg.mxu0
    %v162 = vld [vmem:[#allocation5] sm:$0xff]
    %v163 = vld [vmem:[#allocation5 + $0x8] sm:$0xff]
    %v164 = vld [vmem:[#allocation5 + $0x10] sm:$0xff]
    %v165 = vld [vmem:[#allocation5 + $0x18] sm:$0xff]
    %v166 = vld [vmem:[#allocation5 + $0x20] sm:$0xff]
    %v167 = vld [vmem:[#allocation5 + $0x28] sm:$0xff]
    %v168 = vld [vmem:[#allocation5 + $0x30] sm:$0xff]
    %v169 = vld [vmem:[#allocation5 + $0x38] sm:$0xff]
    %v170 = vld [vmem:[#allocation5 + $0x40] sm:$0xff]
    %v171 = vld [vmem:[#allocation5 + $0x48] sm:$0xff]
    %v172 = vld [vmem:[#allocation5 + $0x50] sm:$0xff]
    %v173 = vld [vmem:[#allocation5 + $0x58] sm:$0xff]
    %v174 = vld [vmem:[#allocation5 + $0x60] sm:$0xff]
    %v175 = vld [vmem:[#allocation5 + $0x68] sm:$0xff]
    %v176 = vld [vmem:[#allocation5 + $0x70] sm:$0xff]
    %v177 = vld [vmem:[#allocation5 + $0x78] sm:$0xff]
    %v178 = vld [vmem:[#allocation5 + $0x80] sm:$0xff]
    %v179 = vld [vmem:[#allocation5 + $0x88] sm:$0xff]
    %v180 = vld [vmem:[#allocation5 + $0x90] sm:$0xff]
    %v181 = vld [vmem:[#allocation5 + $0x98] sm:$0xff]
    %v182 = vld [vmem:[#allocation5 + $0xa0] sm:$0xff]
    %v183 = vld [vmem:[#allocation5 + $0xa8] sm:$0xff]
    %v184 = vld [vmem:[#allocation5 + $0xb0] sm:$0xff]
    %v185 = vld [vmem:[#allocation5 + $0xb8] sm:$0xff]
    %v186 = vld [vmem:[#allocation5 + $0xc0] sm:$0xff]
    %v187 = vld [vmem:[#allocation5 + $0xc8] sm:$0xff]
    %v188 = vld [vmem:[#allocation5 + $0xd0] sm:$0xff]
    %v189 = vld [vmem:[#allocation5 + $0xd8] sm:$0xff]
    %v190 = vld [vmem:[#allocation5 + $0xe0] sm:$0xff]
    %v191 = vld [vmem:[#allocation5 + $0xe8] sm:$0xff]
    %v192 = vld [vmem:[#allocation5 + $0xf0] sm:$0xff]
    %v193 = vld [vmem:[#allocation5 + $0xf8] sm:$0xff]
    %v194 = vld [vmem:[#allocation5 + $0x100] sm:$0xff]
    %v195 = vld [vmem:[#allocation5 + $0x108] sm:$0xff]
    %v196 = vld [vmem:[#allocation5 + $0x110] sm:$0xff]
    %v197 = vld [vmem:[#allocation5 + $0x118] sm:$0xff]
    %v198 = vld [vmem:[#allocation5 + $0x120] sm:$0xff]
    %v199 = vld [vmem:[#allocation5 + $0x128] sm:$0xff]
    %v200 = vld [vmem:[#allocation5 + $0x130] sm:$0xff]
    %v201 = vld [vmem:[#allocation5 + $0x138] sm:$0xff]
    %v202 = vld [vmem:[#allocation5 + $0x140] sm:$0xff]
    %v203 = vld [vmem:[#allocation5 + $0x148] sm:$0xff]
    %v204 = vld [vmem:[#allocation5 + $0x150] sm:$0xff]
    %v205 = vld [vmem:[#allocation5 + $0x158] sm:$0xff]
    %v206 = vld [vmem:[#allocation5 + $0x160] sm:$0xff]
    %v207 = vld [vmem:[#allocation5 + $0x168] sm:$0xff]
    %v208 = vld [vmem:[#allocation5 + $0x170] sm:$0xff]
    %v209 = vld [vmem:[#allocation5 + $0x178] sm:$0xff]
    %v210 = vld [vmem:[%s4] sm:$0x7]
    %v212 = vperm.slane %v210, 0
    %v213 = vperm.slane %v210, 1
    %v214 = vperm.slane %v210, 2
    %218 = vmatpush.msra.mxu0 %v207
    %219 = vmatpush.msra.mxu0 %v204
    %220 = vmatpush.msra.mxu0 %v201
    %221 = vmatpush.msra.mxu0 %v198
    %222 = vmatpush.msra.mxu0 %v195
    %223 = vmatpush.msra.mxu0 %v192
    %224 = vmatpush.msra.mxu0 %v189
    %225 = vmatpush.msra.mxu0 %v186
    %226 = vmatpush.msra.mxu0 %v183
    %227 = vmatpush.msra.mxu0 %v180
    %228 = vmatpush.msra.mxu0 %v177
    %229 = vmatpush.msra.mxu0 %v174
    %230 = vmatpush.msra.mxu0 %v171
    %231 = vmatpush.msra.mxu0 %v168
    %232 = vmatpush.msra.mxu0 %v165
    %233 = vmatpush.msra.mxu0 %v162
    %234 = vmatmul.f32.gmra.mxu0 %v82
    %v235 = vpop.f32.mrf.mxu0
    %v236 = vadd.f32 %v212, %v235
    %237 = vdwg.mxu0
    %238 = vmatpush.msra.mxu0 %v208
    %239 = vmatpush.msra.mxu0 %v205
    %240 = vmatpush.msra.mxu0 %v202
    %241 = vmatpush.msra.mxu0 %v199
    %242 = vmatpush.msra.mxu0 %v196
    %243 = vmatpush.msra.mxu0 %v193
    %244 = vmatpush.msra.mxu0 %v190
    %245 = vmatpush.msra.mxu0 %v187
    %246 = vmatpush.msra.mxu0 %v184
    %247 = vmatpush.msra.mxu0 %v181
    %248 = vmatpush.msra.mxu0 %v178
    %249 = vmatpush.msra.mxu0 %v175
    %250 = vmatpush.msra.mxu0 %v172
    %251 = vmatpush.msra.mxu0 %v169
    %252 = vmatpush.msra.mxu0 %v166
    %253 = vmatpush.msra.mxu0 %v163
    %254 = vmatmul.f32.gmra.mxu0 %v82
    %v255 = vpop.f32.mrf.mxu0
    %v256 = vadd.f32 %v213, %v255
    %257 = vdwg.mxu0
    %258 = vmatpush.msra.mxu0 %v209
    %259 = vmatpush.msra.mxu0 %v206
    %260 = vmatpush.msra.mxu0 %v203
    %261 = vmatpush.msra.mxu0 %v200
    %262 = vmatpush.msra.mxu0 %v197
    %263 = vmatpush.msra.mxu0 %v194
    %264 = vmatpush.msra.mxu0 %v191
    %265 = vmatpush.msra.mxu0 %v188
    %266 = vmatpush.msra.mxu0 %v185
    %267 = vmatpush.msra.mxu0 %v182
    %268 = vmatpush.msra.mxu0 %v179
    %269 = vmatpush.msra.mxu0 %v176
    %270 = vmatpush.msra.mxu0 %v173
    %271 = vmatpush.msra.mxu0 %v170
    %272 = vmatpush.msra.mxu0 %v167
    %273 = vmatpush.msra.mxu0 %v164
    %274 = vmatmul.f32.gmra.mxu0 %v82
    %v275 = vpop.f32.mrf.mxu0
    %v276 = vadd.f32 %v214, %v275
    %277 = vdwg.mxu0
    %v278 = vadd.f32 %v120, %v236
    %v279 = vadd.f32 %v140, %v256
    %v280 = vxor.u32 %v278, 2147483648
    %v281 = vxor.u32 %v279, 2147483648
    %v282 = vmul.f32 %v280, 1.442695
    %v283 = vpow.pop %v282
    %v284 = vmul.f32 %v281, 1.442695
    %v285 = vpow.pop %v284
    %v286 = vadd.f32 %v283, 1.0
    %v287 = vadd.f32 %v285, 1.0
    %v288 = vrcp.pop %v286
    %v289 = vmul.f32 %v286, %v288
    %v290 = vsub.f32 1.0, %v289
    %v291 = vmul.f32 %v288, %v290
    %v292 = vadd.f32 %v288, %v291
    %vm293 = vweird.f32 %v286
    %vm294 = vweird.f32 %v288
    %vm295 = vmor %vm293, %vm294
    %v296 = vsel %vm295, %v288, %v292
    %v297 = vand.u32 2147483647, %v286
    %vm298 = vcmp.eq.f32.partialorder %v297, 8.507059e+37
    %v299 = vand.u32 %v286, 2147483648
    %v300 = vor.u32 1.1754944e-38, %v299
    %v301 = vsel %vm298, %v300, %v296
    %v302 = vmul.f32 1.0, %v301
    %v303 = vrcp.pop %v287
    %v304 = vmul.f32 %v287, %v303
    %v305 = vsub.f32 1.0, %v304
    %v306 = vmul.f32 %v303, %v305
    %v307 = vadd.f32 %v303, %v306
    %vm308 = vweird.f32 %v287
    %vm309 = vweird.f32 %v303
    %vm310 = vmor %vm308, %vm309
    %v311 = vsel %vm310, %v303, %v307
    %v312 = vand.u32 2147483647, %v287
    %vm313 = vcmp.eq.f32.partialorder %v312, 8.507059e+37
    %v314 = vand.u32 %v287, 2147483648
    %v315 = vor.u32 1.1754944e-38, %v314
    %v316 = vsel %vm313, %v315, %v311
    %v317 = vmul.f32 1.0, %v316
    %v318 = vmul.f32 %v302, %v276
    %v319 = vadd.f32 %v160, %v318
    %v320 = vtanh.pop %v319
    %v321 = vsub.f32 %v82, %v320
    %v322 = vmul.f32 %v317, %v321
    %v323 = vadd.f32 %v320, %v322
    %324 = vst [vmem:[%s8] sm:$0xff] %v323
    %v325 = vld [vmem:[#allocation7] sm:$0xff]
    %v326 = vld [vmem:[#allocation7 + $0x8] sm:$0xff]
    %v327 = vld [vmem:[#allocation7 + $0x10] sm:$0xff]
    %v328 = vld [vmem:[#allocation7 + $0x18] sm:$0xff]
    %v329 = vld [vmem:[#allocation7 + $0x20] sm:$0xff]
    %v330 = vld [vmem:[#allocation7 + $0x28] sm:$0xff]
    %v331 = vld [vmem:[#allocation7 + $0x30] sm:$0xff]
    %v332 = vld [vmem:[#allocation7 + $0x38] sm:$0xff]
    %v333 = vld [vmem:[#allocation7 + $0x40] sm:$0xff]
    %v334 = vld [vmem:[#allocation7 + $0x48] sm:$0xff]
    %v335 = vld [vmem:[#allocation7 + $0x50] sm:$0xff]
    %v336 = vld [vmem:[#allocation7 + $0x58] sm:$0xff]
    %v337 = vld [vmem:[#allocation7 + $0x60] sm:$0xff]
    %v338 = vld [vmem:[#allocation7 + $0x68] sm:$0xff]
    %v339 = vld [vmem:[#allocation7 + $0x70] sm:$0xff]
    %v340 = vld [vmem:[#allocation7 + $0x78] sm:$0xff]
    %v341 = vld [vmem:[%s6] sm:$0x1]
    %v343 = vperm.slane %v341, 0
    %345 = vmatpush.msra.mxu0 %v340
    %346 = vmatpush.msra.mxu0 %v339
    %347 = vmatpush.msra.mxu0 %v338
    %348 = vmatpush.msra.mxu0 %v337
    %349 = vmatpush.msra.mxu0 %v336
    %350 = vmatpush.msra.mxu0 %v335
    %351 = vmatpush.msra.mxu0 %v334
    %352 = vmatpush.msra.mxu0 %v333
    %353 = vmatpush.msra.mxu0 %v332
    %354 = vmatpush.msra.mxu0 %v331
    %355 = vmatpush.msra.mxu0 %v330
    %356 = vmatpush.msra.mxu0 %v329
    %357 = vmatpush.msra.mxu0 %v328
    %358 = vmatpush.msra.mxu0 %v327
    %359 = vmatpush.msra.mxu0 %v326
    %360 = vmatpush.msra.mxu0 %v325
    %361 = vmatmul.f32.gmra.mxu0 %v323
    %v362 = vpop.f32.mrf.mxu0
    %v363 = vadd.f32 %v343, %v362
    %364 = vdwg.mxu0
    %365 = vst [vmem:[#allocation8] sm:$0xff] %v363
    // Predicated region
    $region46: #{decoder_forward_steps.1} parent=1 // pred_check
      _
    $region47: #{decoder_forward_steps.1} parent=1 // pred_check_branch
      %367 = sbr.rel (0) target = $region49
    $region48: #{decoder_forward_steps.1} parent=1 // pred_region
      %369 = vsyncadd [#allocation4], 0
      %s371 = sshll.u32 [#allocation8], 4
      %s372 = int_to_ptr.vmem [resolvable:$true] %s371
      %s373 = sshll.u32 %s7, 4
      %s374 = int_to_ptr.hbm [resolvable:$true] %s373
      %376 = dma.vmem_to_hbm [thread:$0]  %s372, 128, %s374, [#allocation4]
    $region49: #{decoder_forward_steps.1} parent=1 // pred_fallthru
      _
    // Predicated region
    $region50: #{decoder_forward_steps.1} parent=1 // pred_check
      _
    $region51: #{decoder_forward_steps.1} parent=1 // pred_check_branch
      %378 = sbr.rel (0) target = $region53
    $region52: #{decoder_forward_steps.1} parent=1 // pred_region
      _
    $region53: #{decoder_forward_steps.1} parent=1 // pred_fallthru
      _
    // Predicated region
    $region54: #{decoder_forward_steps.1} parent=1 // pred_check
      _
    $region55: #{decoder_forward_steps.1} parent=1 // pred_check_branch
      %380 = sbr.rel (0) target = $region57
    $region56: #{decoder_forward_steps.1} parent=1 // pred_region
      %382 = dma.done [#allocation4], 128
    $region57: #{decoder_forward_steps.1} parent=1 // pred_fallthru
      _
    // Predicated region
    $region58: #{decoder_forward_steps.1} parent=1 // pred_check
      _
    $region59: #{decoder_forward_steps.1} parent=1 // pred_check_branch
      %384 = sbr.rel (0) target = $region61
    $region60: #{decoder_forward_steps.1} parent=1 // pred_region
      _
    $region61: #{decoder_forward_steps.1} parent=1 // pred_fallthru
      _
    %385 = vsyncpa [#allocation3], 1
    %386 = vsyncpa [#allocation6], 1
    %387 = vsyncpa [#allocation4], 1

</llo_original>
